<compile_context>
chip_gen: v7x
topology: tpu7x:2x2x1
jax: 0.10.0
libtpu: 0.0.40
codegen_flags: <defaults>
</compile_context>

<pallas_src>
import functools

import jax
import jax.numpy as jnp
from jax.experimental import pallas as pl
from jax.experimental.pallas import tpu as pltpu


def _decoder_kernel(x_ref, eps_ref, w_ref, b_ref, sig_ref, o_ref, *, spike_ts):
    """One grid step = one batch tile; everything lane-dense.

    x_ref   : (T, TB, A*P)  pop spikes, native dtype (int8 {0,1} or bf16/f32)
    eps_ref : (T, TB, A)    noise samples, native dtype (e.g. bf16)
    w_ref   : (A*P, A)      block-diagonal grouped-conv weight, f32
    b_ref   : (1, A)        conv bias, f32
    sig_ref : (1, A)        NoisyNonSpikingIFNode sigma, f32
    o_ref   : (TB, A)       last membrane potential (decode='last-mem'), f32
    """
    T = spike_ts
    tb, ap = x_ref.shape[1], x_ref.shape[2]
    a = eps_ref.shape[2]

    # Binary integer spikes: exact int32 accumulation, upcast once per tile.
    # Float spikes: f32 accumulation slab-by-slab (never a full (T,TB,AP) f32
    # copy live in vregs/VMEM).  f32 math keeps v5e (no bf16 VPU) correct.
    x_acc_dtype = jnp.int32 if jnp.issubdtype(x_ref.dtype, jnp.integer) else jnp.float32

    x_sum = jnp.zeros((tb, ap), x_acc_dtype)
    eps_sum = jnp.zeros((tb, a), jnp.float32)
    # T is a small compile-time constant for this decoder -> static unroll.
    for t in range(T):
        x_sum = x_sum + x_ref[t].astype(x_acc_dtype)
        eps_sum = eps_sum + eps_ref[t].astype(jnp.float32)

    # Grouped conv (kernel == pop_dim) over the T-summed spikes as one matmul
    # against the block-diagonal weight: stays lane-dense, no XLU reduce.
    conv_sum = jnp.dot(x_sum.astype(jnp.float32), w_ref[...],
                       preferred_element_type=jnp.float32)          # (TB, A)

    # v_T = conv(sum_t x_t) + T * bias + sigma * sum_t eps_t
    # (valid only for the pure non-leaky integrator with decode='last-mem').
    o_ref[...] = conv_sum + jnp.float32(T) * b_ref[...] + sig_ref[...] * eps_sum


def noisy_pop_spike_decoder(out_pop_spikes, w, bias, sigma, eps,
                            *, act_dim, pop_dim, spike_ts, batch_tile=512):
    """out_pop_spikes: (T, B, act_dim*pop_dim) -> (B, act_dim) f32.

    w is the grouped Conv1d weight squeezed to (act_dim, pop_dim)
    (PyTorch stores it as (act_dim, 1, pop_dim)); channel a owns lanes
    a*pop_dim .. a*pop_dim + pop_dim - 1, matching the encoder's ordering.
    """
    T, B, AP = out_pop_spikes.shape
    A, P = act_dim, pop_dim
    assert T == spike_ts and AP == A * P
    assert eps.shape == (T, B, A)

    # Block-diagonal expansion of the grouped-conv weight, built once (tiny):
    #   w_exp[a*P + p, a'] = w[a, p] if a == a' else 0
    eye = jnp.eye(A, dtype=jnp.float32)
    w_exp = (w.astype(jnp.float32)[:, :, None] * eye[:, None, :]).reshape(AP, A)

    bias2 = bias.reshape(1, A).astype(jnp.float32)
    sigma2 = sigma.reshape(1, A).astype(jnp.float32)

    # Batch tile: full B when small; otherwise a multiple of 32 (covers int8's
    # (32,128) packing as well as f32's (8,128)).  Per-step bytes stay in the
    # hundreds-of-KiB range, well under scoped VMEM on v5e/v6e/v7x.
    tb = B if B <= batch_tile else batch_tile
    grid = (pl.cdiv(B, tb),)

    kernel = functools.partial(_decoder_kernel, spike_ts=T)
    return pl.pallas_call(
        kernel,
        out_shape=jax.ShapeDtypeStruct((B, A), jnp.float32),
        grid=grid,
        in_specs=[
            pl.BlockSpec((T, tb, AP), lambda i: (0, i, 0)),   # spikes (lane-dense)
            pl.BlockSpec((T, tb, A), lambda i: (0, i, 0)),    # eps
            pl.BlockSpec((AP, A), lambda i: (0, 0)),          # block-diag weight
            pl.BlockSpec((1, A), lambda i: (0, 0)),           # bias
            pl.BlockSpec((1, A), lambda i: (0, 0)),           # sigma
        ],
        out_specs=pl.BlockSpec((tb, A), lambda i: (i, 0)),
        compiler_params=pltpu.CompilerParams(
            dimension_semantics=("parallel",)),               # shards B on v7x's 2 TCs
    )(out_pop_spikes, eps, w_exp, bias2, sigma2)


def _reference(out_pop_spikes, w, bias, sigma, eps, *, act_dim, pop_dim, spike_ts):
    """Pure-JAX reference of the PyTorch forward (f32 math, same inputs)."""
    x = out_pop_spikes.astype(jnp.float32).reshape(spike_ts, -1, act_dim, pop_dim)
    conv = jnp.einsum("tbap,ap->tba", x, w.astype(jnp.float32)) + bias[None, None, :]
    v = jnp.sum(conv + sigma[None, None, :] * eps.astype(jnp.float32), axis=0)
    return v


if __name__ == "__main__":
    # Small shapes consistent with the module.
    act_dim = 4
    pop_dim = 8
    spike_ts = 8
    batch = 2
    sigma_init = 0.5
    beta = 0.3  # colored-noise generation parameter only; not in the forward pass

    key = jax.random.PRNGKey(0)
    k_x, k_w, k_b, k_eps = jax.random.split(key, 4)

    # Pop spikes in {0, 1}, shape (T, B, act_dim*pop_dim), shipped as int8
    # (halves the dominant HBM traffic; the kernel widens exactly in int32).
    out_pop_spikes = (
        jax.random.uniform(k_x, (spike_ts, batch, act_dim * pop_dim)) > 0.5
    ).astype(jnp.int8)

    # Conv1d(act_dim, act_dim, pop_dim, groups=act_dim) parameters, squeezed to (A, P).
    w = jax.random.normal(k_w, (act_dim, pop_dim), jnp.float32) * 0.1
    bias = jax.random.normal(k_b, (act_dim,), jnp.float32) * 0.01
    sigma = jnp.full((act_dim,), sigma_init, jnp.float32)

    # Deterministic "colored" noise stand-in per (t, b, act_dim), bf16 on the wire.
    eps = jax.random.normal(k_eps, (spike_ts, batch, act_dim), jnp.bfloat16)

    out = noisy_pop_spike_decoder(
        out_pop_spikes, w, bias, sigma, eps,
        act_dim=act_dim, pop_dim=pop_dim, spike_ts=spike_ts)
    out = jax.block_until_ready(out)

    ref = _reference(out_pop_spikes, w, bias, sigma, eps,
                     act_dim=act_dim, pop_dim=pop_dim, spike_ts=spike_ts)

    assert out.shape == (batch, act_dim)
    assert jnp.allclose(out, ref, atol=1e-4, rtol=1e-4), (out, ref)

    print("KERNEL_OK")
</pallas_src>

<mosaic_0001>
module attributes {stable_mosaic.version = 11 : i64} {
  func.func @_decoder_kernel(%arg0: i32, %arg1: memref<8x2x32xi8, #tpu.memory_space<vmem>>, %arg2: memref<8x2x4xbf16, #tpu.memory_space<vmem>>, %arg3: memref<32x4xf32, #tpu.memory_space<vmem>>, %arg4: memref<1x4xf32, #tpu.memory_space<vmem>>, %arg5: memref<1x4xf32, #tpu.memory_space<vmem>>, %arg6: memref<2x4xf32, #tpu.memory_space<vmem>>) attributes {dimension_semantics = [#tpu.dimension_semantics<parallel>], iteration_bounds = array<i64: 1>, scalar_prefetch = 0 : i64, scratch_operands = 0 : i64, tpu.core_type = #tpu.core_type<tc>, window_params = [{transform_indices = @transform_0, window_bounds = array<i64: 8, 2, 32>}, {transform_indices = @transform_1, window_bounds = array<i64: 8, 2, 4>}, {pipeline_mode = #tpu.pipeline_mode<synchronous>, transform_indices = @transform_2, window_bounds = array<i64: 32, 4>}, {pipeline_mode = #tpu.pipeline_mode<synchronous>, transform_indices = @transform_3, window_bounds = array<i64: 1, 4>}, {pipeline_mode = #tpu.pipeline_mode<synchronous>, transform_indices = @transform_4, window_bounds = array<i64: 1, 4>}, {transform_indices = @transform_5, window_bounds = array<i64: 2, 4>}]} {
    %c0_i32 = arith.constant 0 : i32
    %0 = vector.broadcast %c0_i32 : i32 to vector<2x32xi32>
    %cst = arith.constant 0.000000e+00 : f32
    %1 = vector.broadcast %cst : f32 to vector<2x4xf32>
    %c0 = arith.constant 0 : index
    %c0_0 = arith.constant 0 : index
    %c0_1 = arith.constant 0 : index
    %2 = vector.load %arg1[%c0, %c0_0, %c0_1] : memref<8x2x32xi8, #tpu.memory_space<vmem>>, vector<1x2x32xi8>
    %3 = vector.shape_cast %2 : vector<1x2x32xi8> to vector<2x32xi8>
    %4 = arith.extsi %3 : vector<2x32xi8> to vector<2x32xi32>
    %5 = arith.addi %0, %4 : vector<2x32xi32>
    %c0_2 = arith.constant 0 : index
    %c0_3 = arith.constant 0 : index
    %c0_4 = arith.constant 0 : index
    %6 = vector.load %arg2[%c0_2, %c0_3, %c0_4] : memref<8x2x4xbf16, #tpu.memory_space<vmem>>, vector<1x2x4xbf16>
    %7 = vector.shape_cast %6 : vector<1x2x4xbf16> to vector<2x4xbf16>
    %8 = arith.extf %7 : vector<2x4xbf16> to vector<2x4xf32>
    %9 = arith.addf %1, %8 : vector<2x4xf32>
    %c1 = arith.constant 1 : index
    %c0_5 = arith.constant 0 : index
    %c0_6 = arith.constant 0 : index
    %10 = vector.load %arg1[%c1, %c0_5, %c0_6] : memref<8x2x32xi8, #tpu.memory_space<vmem>>, vector<1x2x32xi8>
    %11 = vector.shape_cast %10 : vector<1x2x32xi8> to vector<2x32xi8>
    %12 = arith.extsi %11 : vector<2x32xi8> to vector<2x32xi32>
    %13 = arith.addi %5, %12 : vector<2x32xi32>
    %c1_7 = arith.constant 1 : index
    %c0_8 = arith.constant 0 : index
    %c0_9 = arith.constant 0 : index
    %14 = vector.load %arg2[%c1_7, %c0_8, %c0_9] : memref<8x2x4xbf16, #tpu.memory_space<vmem>>, vector<1x2x4xbf16>
    %15 = vector.shape_cast %14 : vector<1x2x4xbf16> to vector<2x4xbf16>
    %16 = arith.extf %15 : vector<2x4xbf16> to vector<2x4xf32>
    %17 = arith.addf %9, %16 : vector<2x4xf32>
    %c2 = arith.constant 2 : index
    %c0_10 = arith.constant 0 : index
    %c0_11 = arith.constant 0 : index
    %18 = vector.load %arg1[%c2, %c0_10, %c0_11] : memref<8x2x32xi8, #tpu.memory_space<vmem>>, vector<1x2x32xi8>
    %19 = vector.shape_cast %18 : vector<1x2x32xi8> to vector<2x32xi8>
    %20 = arith.extsi %19 : vector<2x32xi8> to vector<2x32xi32>
    %21 = arith.addi %13, %20 : vector<2x32xi32>
    %c2_12 = arith.constant 2 : index
    %c0_13 = arith.constant 0 : index
    %c0_14 = arith.constant 0 : index
    %22 = vector.load %arg2[%c2_12, %c0_13, %c0_14] : memref<8x2x4xbf16, #tpu.memory_space<vmem>>, vector<1x2x4xbf16>
    %23 = vector.shape_cast %22 : vector<1x2x4xbf16> to vector<2x4xbf16>
    %24 = arith.extf %23 : vector<2x4xbf16> to vector<2x4xf32>
    %25 = arith.addf %17, %24 : vector<2x4xf32>
    %c3 = arith.constant 3 : index
    %c0_15 = arith.constant 0 : index
    %c0_16 = arith.constant 0 : index
    %26 = vector.load %arg1[%c3, %c0_15, %c0_16] : memref<8x2x32xi8, #tpu.memory_space<vmem>>, vector<1x2x32xi8>
    %27 = vector.shape_cast %26 : vector<1x2x32xi8> to vector<2x32xi8>
    %28 = arith.extsi %27 : vector<2x32xi8> to vector<2x32xi32>
    %29 = arith.addi %21, %28 : vector<2x32xi32>
    %c3_17 = arith.constant 3 : index
    %c0_18 = arith.constant 0 : index
    %c0_19 = arith.constant 0 : index
    %30 = vector.load %arg2[%c3_17, %c0_18, %c0_19] : memref<8x2x4xbf16, #tpu.memory_space<vmem>>, vector<1x2x4xbf16>
    %31 = vector.shape_cast %30 : vector<1x2x4xbf16> to vector<2x4xbf16>
    %32 = arith.extf %31 : vector<2x4xbf16> to vector<2x4xf32>
    %33 = arith.addf %25, %32 : vector<2x4xf32>
    %c4 = arith.constant 4 : index
    %c0_20 = arith.constant 0 : index
    %c0_21 = arith.constant 0 : index
    %34 = vector.load %arg1[%c4, %c0_20, %c0_21] : memref<8x2x32xi8, #tpu.memory_space<vmem>>, vector<1x2x32xi8>
    %35 = vector.shape_cast %34 : vector<1x2x32xi8> to vector<2x32xi8>
    %36 = arith.extsi %35 : vector<2x32xi8> to vector<2x32xi32>
    %37 = arith.addi %29, %36 : vector<2x32xi32>
    %c4_22 = arith.constant 4 : index
    %c0_23 = arith.constant 0 : index
    %c0_24 = arith.constant 0 : index
    %38 = vector.load %arg2[%c4_22, %c0_23, %c0_24] : memref<8x2x4xbf16, #tpu.memory_space<vmem>>, vector<1x2x4xbf16>
    %39 = vector.shape_cast %38 : vector<1x2x4xbf16> to vector<2x4xbf16>
    %40 = arith.extf %39 : vector<2x4xbf16> to vector<2x4xf32>
    %41 = arith.addf %33, %40 : vector<2x4xf32>
    %c5 = arith.constant 5 : index
    %c0_25 = arith.constant 0 : index
    %c0_26 = arith.constant 0 : index
    %42 = vector.load %arg1[%c5, %c0_25, %c0_26] : memref<8x2x32xi8, #tpu.memory_space<vmem>>, vector<1x2x32xi8>
    %43 = vector.shape_cast %42 : vector<1x2x32xi8> to vector<2x32xi8>
    %44 = arith.extsi %43 : vector<2x32xi8> to vector<2x32xi32>
    %45 = arith.addi %37, %44 : vector<2x32xi32>
    %c5_27 = arith.constant 5 : index
    %c0_28 = arith.constant 0 : index
    %c0_29 = arith.constant 0 : index
    %46 = vector.load %arg2[%c5_27, %c0_28, %c0_29] : memref<8x2x4xbf16, #tpu.memory_space<vmem>>, vector<1x2x4xbf16>
    %47 = vector.shape_cast %46 : vector<1x2x4xbf16> to vector<2x4xbf16>
    %48 = arith.extf %47 : vector<2x4xbf16> to vector<2x4xf32>
    %49 = arith.addf %41, %48 : vector<2x4xf32>
    %c6 = arith.constant 6 : index
    %c0_30 = arith.constant 0 : index
    %c0_31 = arith.constant 0 : index
    %50 = vector.load %arg1[%c6, %c0_30, %c0_31] : memref<8x2x32xi8, #tpu.memory_space<vmem>>, vector<1x2x32xi8>
    %51 = vector.shape_cast %50 : vector<1x2x32xi8> to vector<2x32xi8>
    %52 = arith.extsi %51 : vector<2x32xi8> to vector<2x32xi32>
    %53 = arith.addi %45, %52 : vector<2x32xi32>
    %c6_32 = arith.constant 6 : index
    %c0_33 = arith.constant 0 : index
    %c0_34 = arith.constant 0 : index
    %54 = vector.load %arg2[%c6_32, %c0_33, %c0_34] : memref<8x2x4xbf16, #tpu.memory_space<vmem>>, vector<1x2x4xbf16>
    %55 = vector.shape_cast %54 : vector<1x2x4xbf16> to vector<2x4xbf16>
    %56 = arith.extf %55 : vector<2x4xbf16> to vector<2x4xf32>
    %57 = arith.addf %49, %56 : vector<2x4xf32>
    %c7 = arith.constant 7 : index
    %c0_35 = arith.constant 0 : index
    %c0_36 = arith.constant 0 : index
    %58 = vector.load %arg1[%c7, %c0_35, %c0_36] : memref<8x2x32xi8, #tpu.memory_space<vmem>>, vector<1x2x32xi8>
    %59 = vector.shape_cast %58 : vector<1x2x32xi8> to vector<2x32xi8>
    %60 = arith.extsi %59 : vector<2x32xi8> to vector<2x32xi32>
    %61 = arith.addi %53, %60 : vector<2x32xi32>
    %c7_37 = arith.constant 7 : index
    %c0_38 = arith.constant 0 : index
    %c0_39 = arith.constant 0 : index
    %62 = vector.load %arg2[%c7_37, %c0_38, %c0_39] : memref<8x2x4xbf16, #tpu.memory_space<vmem>>, vector<1x2x4xbf16>
    %63 = vector.shape_cast %62 : vector<1x2x4xbf16> to vector<2x4xbf16>
    %64 = arith.extf %63 : vector<2x4xbf16> to vector<2x4xf32>
    %65 = arith.addf %57, %64 : vector<2x4xf32>
    %66 = arith.sitofp %61 : vector<2x32xi32> to vector<2x32xf32>
    %c0_40 = arith.constant 0 : index
    %c0_41 = arith.constant 0 : index
    %67 = vector.load %arg3[%c0_40, %c0_41] : memref<32x4xf32, #tpu.memory_space<vmem>>, vector<32x4xf32>
    %cst_42 = arith.constant dense<0.000000e+00> : vector<2x4xf32>
    %68 = tpu.matmul %66, %67, %cst_42 {dimension_numbers = #tpu.dot_dimension_numbers<[1], [0], [0], [1], [0, 0, 1, 1], [], []>} : vector<2x32xf32>, vector<32x4xf32>, vector<2x4xf32> -> vector<2x4xf32>
    %c0_43 = arith.constant 0 : index
    %c0_44 = arith.constant 0 : index
    %69 = vector.load %arg4[%c0_43, %c0_44] : memref<1x4xf32, #tpu.memory_space<vmem>>, vector<1x4xf32>
    %cst_45 = arith.constant 8.000000e+00 : f32
    %70 = vector.broadcast %cst_45 : f32 to vector<1x4xf32>
    %71 = arith.mulf %70, %69 : vector<1x4xf32>
    %72 = vector.broadcast %71 : vector<1x4xf32> to vector<2x4xf32>
    %73 = arith.addf %68, %72 : vector<2x4xf32>
    %c0_46 = arith.constant 0 : index
    %c0_47 = arith.constant 0 : index
    %74 = vector.load %arg5[%c0_46, %c0_47] : memref<1x4xf32, #tpu.memory_space<vmem>>, vector<1x4xf32>
    %75 = vector.broadcast %74 : vector<1x4xf32> to vector<2x4xf32>
    %76 = arith.mulf %75, %65 : vector<2x4xf32>
    %77 = arith.addf %73, %76 : vector<2x4xf32>
    %c0_48 = arith.constant 0 : index
    %c0_49 = arith.constant 0 : index
    %78 = vector.load %arg6[%c0_48, %c0_49] : memref<2x4xf32, #tpu.memory_space<vmem>>, vector<2x4xf32>
    tpu.vector_store %arg6[%c0_48, %c0_49], %77 {strides = array<i32>} : memref<2x4xf32, #tpu.memory_space<vmem>>, vector<2x4xf32>,
    return
  }
  func.func @transform_0(%arg0: i32) -> (i32, i32, i32) {
    %c0_i32 = arith.constant 0 : i32
    %c0_i32_0 = arith.constant 0 : i32
    %c0_i32_1 = arith.constant 0 : i32
    return %c0_i32, %arg0, %c0_i32_0 : i32, i32, i32
  }
  func.func @transform_1(%arg0: i32) -> (i32, i32, i32) {
    %c0_i32 = arith.constant 0 : i32
    %c0_i32_0 = arith.constant 0 : i32
    %c0_i32_1 = arith.constant 0 : i32
    return %c0_i32, %arg0, %c0_i32_0 : i32, i32, i32
  }
  func.func @transform_2(%arg0: i32) -> (i32, i32) {
    %c0_i32 = arith.constant 0 : i32
    %c0_i32_0 = arith.constant 0 : i32
    %c0_i32_1 = arith.constant 0 : i32
    return %c0_i32, %c0_i32_0 : i32, i32
  }
  func.func @transform_3(%arg0: i32) -> (i32, i32) {
    %c0_i32 = arith.constant 0 : i32
    %c0_i32_0 = arith.constant 0 : i32
    %c0_i32_1 = arith.constant 0 : i32
    return %c0_i32, %c0_i32_0 : i32, i32
  }
  func.func @transform_4(%arg0: i32) -> (i32, i32) {
    %c0_i32 = arith.constant 0 : i32
    %c0_i32_0 = arith.constant 0 : i32
    %c0_i32_1 = arith.constant 0 : i32
    return %c0_i32, %c0_i32_0 : i32, i32
  }
  func.func @transform_5(%arg0: i32) -> (i32, i32) {
    %c0_i32 = arith.constant 0 : i32
    %c0_i32_0 = arith.constant 0 : i32
    return %arg0, %c0_i32 : i32, i32
  }
}

</mosaic_0001>

<llo_original>
// kernel: tpu_custom_call.1
$region0: #{tpu_custom_call.1}
  #allocation0 [shape = 'u32[]', space=smem, size = 0x4, offset = 0x4, fixed_abs, tag = 'smem constant byte address 0x4 - core index']
  #allocation1 [shape = 'u32[144,128]{1,0:T(1,128)}', space=vmem, size = 0x12000, scoped, tag = 'internal scratch']
  %s0 = inlined_call_operand.vmem [shape: s8[8,2,32], index: 0, kind: input, shape index: {}]
  %s1 = inlined_call_operand.vmem [shape: bf16[8,2,4], index: 1, kind: input, shape index: {}]
  %s2 = inlined_call_operand.vmem [shape: f32[32,4], index: 2, kind: input, shape index: {}]
  %s3 = inlined_call_operand.vmem [shape: f32[1,4], index: 3, kind: input, shape index: {}]
  %s4 = inlined_call_operand.vmem [shape: f32[1,4], index: 4, kind: input, shape index: {}]
  %s5 = inlined_call_operand.hbm [shape: f32[2,4], index: 5, kind: output, shape index: {}]
  %s6 = sld [smem:[#allocation0]]
  $region30: #{tpu_custom_call.1} parent=0
    _
  %s8 = ssub.s32 1, %s6
  %s9 = scalar_select 0, %s8, %s6
  $region1: #{tpu_custom_call.1} parent=0
    #allocation2 [shape = 'u8[1024]{0}', space=vmem, size = 0x400, scoped, tag = 'output window, operand 0, single buffered']
    #allocation3 [shape = 's32[1]{0}', space=sflag, size = 0x4, scoped, tag = 'scoped memory for tpu_custom_call.1']
    %10 = vsyncpa [#allocation3], 0
    // Predicated region
    $region2: #{tpu_custom_call.1} parent=1 // pred_check
      _
    $region3: #{tpu_custom_call.1} parent=1 // pred_check_branch
      %12 = sbr.rel (0) target = $region5
    $region4: #{tpu_custom_call.1} parent=1 // pred_region
      _
    $region5: #{tpu_custom_call.1} parent=1 // pred_fallthru
      _
    // Predicated region
    $region6: #{tpu_custom_call.1} parent=1 // pred_check
      _
    $region7: #{tpu_custom_call.1} parent=1 // pred_check_branch
      %14 = sbr.rel (0) target = $region9
    $region8: #{tpu_custom_call.1} parent=1 // pred_region
      _
    $region9: #{tpu_custom_call.1} parent=1 // pred_fallthru
      _
    // Predicated region
    $region10: #{tpu_custom_call.1} parent=1 // pred_check
      _
    $region11: #{tpu_custom_call.1} parent=1 // pred_check_branch
      %16 = sbr.rel (0) target = $region13
    $region12: #{tpu_custom_call.1} parent=1 // pred_region
      _
    $region13: #{tpu_custom_call.1} parent=1 // pred_fallthru
      _
    // Predicated region
    $region14: #{tpu_custom_call.1} parent=1 // pred_check
      _
    $region15: #{tpu_custom_call.1} parent=1 // pred_check_branch
      %18 = sbr.rel (0) target = $region17
    $region16: #{tpu_custom_call.1} parent=1 // pred_region
      _
    $region17: #{tpu_custom_call.1} parent=1 // pred_fallthru
      _
    // Predicated region
    $region18: #{tpu_custom_call.1} parent=1 // pred_check
      _
    $region19: #{tpu_custom_call.1} parent=1 // pred_check_branch
      %20 = sbr.rel (0) target = $region21
    $region20: #{tpu_custom_call.1} parent=1 // pred_region
      _
    $region21: #{tpu_custom_call.1} parent=1 // pred_fallthru
      _
    %v21 = vld [vmem:[%s0] sm:$0x1]
    %v22 = vunpack.c.0.s8 %v21
    %v23 = vld [vmem:[%s1] sm:$0x1]
    %v24 = vunpack.c.l.bf16 %v23
    %v25 = vadd.f32 %v24, 0.0
    %s26 = scalar_lea.vmem %s0, 1
    %v27 = vld [vmem:[%s26] sm:$0x1]
    %v28 = vunpack.c.0.s8 %v27
    %v29 = vadd.s32 %v22, %v28
    %s30 = scalar_lea.vmem %s1, 1
    %v31 = vld [vmem:[%s30] sm:$0x1]
    %v32 = vunpack.c.l.bf16 %v31
    %v33 = vadd.f32 %v25, %v32
    %s34 = scalar_lea.vmem %s0, 2
    %v35 = vld [vmem:[%s34] sm:$0x1]
    %v36 = vunpack.c.0.s8 %v35
    %v37 = vadd.s32 %v29, %v36
    %s38 = scalar_lea.vmem %s1, 2
    %v39 = vld [vmem:[%s38] sm:$0x1]
    %v40 = vunpack.c.l.bf16 %v39
    %v41 = vadd.f32 %v33, %v40
    %s42 = scalar_lea.vmem %s0, 3
    %v43 = vld [vmem:[%s42] sm:$0x1]
    %v44 = vunpack.c.0.s8 %v43
    %v45 = vadd.s32 %v37, %v44
    %s46 = scalar_lea.vmem %s1, 3
    %v47 = vld [vmem:[%s46] sm:$0x1]
    %v48 = vunpack.c.l.bf16 %v47
    %v49 = vadd.f32 %v41, %v48
    %s50 = scalar_lea.vmem %s0, 4
    %v51 = vld [vmem:[%s50] sm:$0x1]
    %v52 = vunpack.c.0.s8 %v51
    %v53 = vadd.s32 %v45, %v52
    %s54 = scalar_lea.vmem %s1, 4
    %v55 = vld [vmem:[%s54] sm:$0x1]
    %v56 = vunpack.c.l.bf16 %v55
    %v57 = vadd.f32 %v49, %v56
    %s58 = scalar_lea.vmem %s0, 5
    %v59 = vld [vmem:[%s58] sm:$0x1]
    %v60 = vunpack.c.0.s8 %v59
    %v61 = vadd.s32 %v53, %v60
    %s62 = scalar_lea.vmem %s1, 5
    %v63 = vld [vmem:[%s62] sm:$0x1]
    %v64 = vunpack.c.l.bf16 %v63
    %v65 = vadd.f32 %v57, %v64
    %s66 = scalar_lea.vmem %s0, 6
    %v67 = vld [vmem:[%s66] sm:$0x1]
    %v68 = vunpack.c.0.s8 %v67
    %v69 = vadd.s32 %v61, %v68
    %s70 = scalar_lea.vmem %s1, 6
    %v71 = vld [vmem:[%s70] sm:$0x1]
    %v72 = vunpack.c.l.bf16 %v71
    %v73 = vadd.f32 %v65, %v72
    %s74 = scalar_lea.vmem %s0, 7
    %v75 = vld [vmem:[%s74] sm:$0x1]
    %v76 = vunpack.c.0.s8 %v75
    %v77 = vadd.s32 %v69, %v76
    %s78 = scalar_lea.vmem %s1, 7
    %v79 = vld [vmem:[%s78] sm:$0x1]
    %v80 = vunpack.c.l.bf16 %v79
    %v81 = vadd.f32 %v73, %v80
    %v82 = vcvt.s32.f32 %v77
    %v83 = vld [vmem:[%s2] sm:$0xff]
    %v84 = vld [vmem:[%s2 + $0x8] sm:$0xff]
    %v85 = vld [vmem:[%s2 + $0x10] sm:$0xff]
    %v86 = vld [vmem:[%s2 + $0x18] sm:$0xff]
    %v87 = vld [vmem:[%s3] sm:$0x1]
    %v88 = vmul.f32 %v87, 8.0
    %v90 = vlaneseq
    %v91 = vshrl.u32 %v90, 7
    %v92 = vsub.s32 0, %v91
    %v93 = vrot.slane %v88, %v92
    %vm95 = vcmask 261120
    %v97 = vsel %vm95, %v82, 0
    %99 = vmatprep.subr.mxu0 0.0
    %100 = vmatpush1.msra.mxu0 %v83
    %101 = vmatprep.subr.mxu0 0.0
    %102 = vmatpush1.msra.mxu0 %v84
    %103 = vmatprep.subr.mxu0 0.0
    %104 = vmatpush1.msra.mxu0 %v85
    %105 = vmatprep.subr.mxu0 0.0
    %106 = vmatpush1.msra.mxu0 %v86
    %107 = vmatprep.subr.mxu0 0.0
    %108 = vmatpush1.msra.mxu0 0.0
    %109 = vmatprep.subr.mxu0 0.0
    %110 = vmatpush1.msra.mxu0 0.0
    %111 = vmatprep.subr.mxu0 0.0
    %112 = vmatpush1.msra.mxu0 0.0
    %113 = vmatprep.subr.mxu0 0.0
    %114 = vmatpush1.msra.mxu0 0.0
    %115 = vmatprep.subr.mxu0 0.0
    %116 = vmatpush1.msra.mxu0 0.0
    %117 = vmatprep.subr.mxu0 0.0
    %118 = vmatpush1.msra.mxu0 0.0
    %119 = vmatprep.subr.mxu0 0.0
    %120 = vmatpush1.msra.mxu0 0.0
    %121 = vmatprep.subr.mxu0 0.0
    %122 = vmatpush1.msra.mxu0 0.0
    %123 = vmatprep.subr.mxu0 0.0
    %124 = vmatpush1.msra.mxu0 0.0
    %125 = vmatprep.subr.mxu0 0.0
    %126 = vmatpush1.msra.mxu0 0.0
    %127 = vmatprep.subr.mxu0 0.0
    %128 = vmatpush1.msra.mxu0 0.0
    %129 = vmatprep.subr.mxu0 0.0
    %130 = vmatpush1.msra.mxu0 0.0
    %131 = vmatprep.subr.mxu0 0.0
    %132 = vmatpush1.msra.mxu0 0.0
    %133 = vmatprep.subr.mxu0 0.0
    %134 = vmatpush1.msra.mxu0 0.0
    %135 = vmatprep.subr.mxu0 0.0
    %136 = vmatpush1.msra.mxu0 0.0
    %137 = vmatprep.subr.mxu0 0.0
    %138 = vmatpush1.msra.mxu0 0.0
    %139 = vmatprep.subr.mxu0 0.0
    %140 = vmatpush1.msra.mxu0 0.0
    %141 = vmatprep.subr.mxu0 0.0
    %142 = vmatpush1.msra.mxu0 0.0
    %143 = vmatprep.subr.mxu0 0.0
    %144 = vmatpush1.msra.mxu0 0.0
    %145 = vmatprep.subr.mxu0 0.0
    %146 = vmatpush1.msra.mxu0 0.0
    %147 = vmatprep.subr.mxu0 0.0
    %148 = vmatpush1.msra.mxu0 0.0
    %149 = vmatprep.subr.mxu0 0.0
    %150 = vmatpush1.msra.mxu0 0.0
    %151 = vmatprep.subr.mxu0 0.0
    %152 = vmatpush1.msra.mxu0 0.0
    %153 = vmatprep.subr.mxu0 0.0
    %154 = vmatpush1.msra.mxu0 0.0
    %155 = vmatprep.subr.mxu0 0.0
    %156 = vmatpush1.msra.mxu0 0.0
    %157 = vmatprep.subr.mxu0 0.0
    %158 = vmatpush1.msra.mxu0 0.0
    %159 = vmatprep.subr.mxu0 0.0
    %160 = vmatpush1.msra.mxu0 0.0
    %161 = vmatprep.subr.mxu0 0.0
    %162 = vmatpush1.msra.mxu0 0.0
    %163 = vmatprep.mubr.f32.mxu0 0.0
    %164 = vmatmul.mubr.f32.gmra.mrb[0].mxu0 %v97
    %v165 = vpop.f32.mrb[0].mxu0
    %v166 = vadd.f32 %v93, %v165
    %v167 = vpop.f32.mrb[0].mxu0
    %168 = vdwg.mxu0
    %v169 = vld [vmem:[%s4] sm:$0x1]
    %v171 = vlaneseq
    %v172 = vshrl.u32 %v171, 7
    %v173 = vsub.s32 0, %v172
    %v174 = vrot.slane %v169, %v173
    %v176 = vmul.f32 %v174, %v81
    %v177 = vadd.f32 %v166, %v176
    %vm178 = vcmask 25600
    %179 = vst.msk [vmem:[#allocation2] sm:$0x3] %vm178, %v177
    // Predicated region
    $region22: #{tpu_custom_call.1} parent=1 // pred_check
      _
    $region23: #{tpu_custom_call.1} parent=1 // pred_check_branch
      %181 = sbr.rel (0) target = $region25
    $region24: #{tpu_custom_call.1} parent=1 // pred_region
      %s183 = ssub.s32 32, 32
      %184 = vsyncadd [#allocation3], %s183
      %s186 = sshll.u32 [#allocation2], 4
      %s187 = int_to_ptr.vmem [resolvable:$true] %s186
      %189 = dma.vmem_to_hbm [thread:$0]  %s187, 32, %s5, [#allocation3]
    $region25: #{tpu_custom_call.1} parent=1 // pred_fallthru
      _
    // Predicated region
    $region26: #{tpu_custom_call.1} parent=1 // pred_check
      _
    $region27: #{tpu_custom_call.1} parent=1 // pred_check_branch
      %191 = sbr.rel (0) target = $region29
    $region28: #{tpu_custom_call.1} parent=1 // pred_region
      %192 = dma.done [#allocation3], 32
    $region29: #{tpu_custom_call.1} parent=1 // pred_fallthru
      _
    %193 = vsyncpa [#allocation3], 1

</llo_original>
